<compile_context>
chip_gen: v7x
topology: tpu7x:2x2x1
jax: 0.10.0
libtpu: 0.0.40
codegen_flags: <defaults>
</compile_context>

<pallas_src>
import functools

import jax
import jax.numpy as jnp
from jax.experimental import pallas as pl
from jax.experimental.pallas import tpu as pltpu

_LANE = 128
_SUBLANE = 8


def _round_down_multiple(x: int, m: int) -> int:
    return (x // m) * m


def _round_up_multiple(x: int, m: int) -> int:
    return ((x + m - 1) // m) * m


def _tpu_vmem_capacity() -> int:
    """Physical VMEM bytes (conservative fallback if the query is unavailable)."""
    try:
        cap = int(pltpu.get_tpu_info().vmem_capacity_bytes)
        if cap > 0:
            return cap
    except Exception:
        pass
    return 64 * 1024 * 1024  # safe lower bound across v5e / v6e / v7x


# ---------------------------------------------------------------------------
# Kernels
# ---------------------------------------------------------------------------

def _softmax_dim0_kernel(x_ref, o_ref):
    """Single-pass softmax over dim 0: full reduction axis resident in block."""
    x = x_ref[...].astype(jnp.float32)
    m = jnp.max(x, axis=0, keepdims=True)
    e = jnp.exp(x - m)
    s = jnp.sum(e, axis=0, keepdims=True)
    # One reciprocal per column (1, tile_cols), then a cheap VPU multiply for
    # the (n, tile_cols) block -- instead of n*tile_cols divides.
    inv = pl.reciprocal(s, approx=False)
    o_ref[...] = (e * inv).astype(o_ref.dtype)


def _softmax_lastdim_kernel(x_ref, o_ref):
    """Softmax over the last (lane) axis -- used for narrow-D / 1-D inputs."""
    x = x_ref[...].astype(jnp.float32)
    m = jnp.max(x, axis=-1, keepdims=True)
    e = jnp.exp(x - m)
    s = jnp.sum(e, axis=-1, keepdims=True)
    o_ref[...] = (e * pl.reciprocal(s, approx=False)).astype(o_ref.dtype)


def _softmax_dim0_stats_kernel(x_ref, m_ref, s_ref, m_acc, s_acc, *, n_total):
    """Pass 1 of the large-N path: online per-column max / sum over the N axis."""
    k = pl.program_id(1)

    @pl.when(k == 0)
    def _():
        m_acc[...] = jnp.full_like(m_acc, -jnp.inf)
        s_acc[...] = jnp.zeros_like(s_acc)

    x = x_ref[...].astype(jnp.float32)
    tile_rows = x_ref.shape[0]
    # Mask padded rows of the last (partial) row block so they don't
    # contaminate the reduction.
    row_ids = k * tile_rows + jax.lax.broadcasted_iota(jnp.int32, x.shape, 0)
    x = jnp.where(row_ids < n_total, x, -jnp.inf)

    m_blk = jnp.max(x, axis=0, keepdims=True)
    m_new = jnp.maximum(m_acc[...], m_blk)
    s_acc[...] = s_acc[...] * jnp.exp(m_acc[...] - m_new) + jnp.sum(
        jnp.exp(x - m_new), axis=0, keepdims=True)
    m_acc[...] = m_new

    @pl.when(k == pl.num_programs(1) - 1)
    def _():
        m_ref[...] = m_acc[...]
        s_ref[...] = s_acc[...]


def _softmax_dim0_norm_kernel(x_ref, m_ref, s_ref, o_ref):
    """Pass 2 of the large-N path: normalize with precomputed per-column stats."""
    x = x_ref[...].astype(jnp.float32)
    inv = pl.reciprocal(s_ref[...], approx=False)
    o_ref[...] = (jnp.exp(x - m_ref[...]) * inv).astype(o_ref.dtype)


# ---------------------------------------------------------------------------
# Wrappers
# ---------------------------------------------------------------------------

def _softmax_lastdim_2d(x: jax.Array, cap: int) -> jax.Array:
    """Softmax over the last axis of a small 2-D array (rows, n) in one block."""
    rows, n = x.shape
    itemsize = max(x.dtype.itemsize, 4)
    block_bytes = rows * n * itemsize * 4  # in + out, double-buffered
    vmem_limit = min(cap, max(block_bytes + (4 << 20), 32 << 20))
    return pl.pallas_call(
        _softmax_lastdim_kernel,
        out_shape=jax.ShapeDtypeStruct((rows, n), x.dtype),
        grid_spec=pltpu.PrefetchScalarGridSpec(
            num_scalar_prefetch=0,
            grid=(1,),
            in_specs=[pl.BlockSpec((rows, n), lambda i: (0, 0))],
            out_specs=pl.BlockSpec((rows, n), lambda i: (0, 0)),
        ),
        compiler_params=pltpu.CompilerParams(
            dimension_semantics=("arbitrary",),
            vmem_limit_bytes=vmem_limit,
        ),
    )(x)


def _softmax_dim0_narrow(x: jax.Array, budget: int, cap: int) -> jax.Array:
    """d < 128: lay the reduction axis on lanes (lane-dense loads/stores)."""
    n, d = x.shape
    itemsize = max(x.dtype.itemsize, 4)
    block_bytes = d * n * itemsize * 4  # in + out, double-buffered

    if block_bytes > budget:
        # Narrow D but a huge reduction axis: pad columns to one lane-width and
        # reuse the general dim-0 path (which has the two-pass fallback).
        xp = jnp.pad(x, ((0, 0), (0, _LANE - d)))
        return softmax_dim0_2d(xp)[:, :d]

    out_t = _softmax_lastdim_2d(x.T, cap)  # (d, n): reduction axis on lanes
    return out_t.T


def _softmax_dim0_two_pass(x: jax.Array, budget: int, cap: int) -> jax.Array:
    """Large-N fallback: grid over N with online max/sum, then normalize."""
    n, d = x.shape
    itemsize = max(x.dtype.itemsize, 4)

    tile_cols = min(512, _round_up_multiple(d, _LANE))
    # ~6x block bytes covers in + out double-buffering plus f32 temporaries.
    max_rows = max(budget // max(tile_cols * itemsize * 6, 1), _SUBLANE)
    tile_rows = max(_SUBLANE, _round_down_multiple(min(max_rows, n), _SUBLANE))
    tile_rows = min(tile_rows, _round_up_multiple(n, _SUBLANE))

    col_tiles = pl.cdiv(d, tile_cols)
    row_tiles = pl.cdiv(n, tile_rows)
    vmem_limit = min(cap, max(6 * tile_rows * tile_cols * itemsize + (4 << 20),
                              32 << 20))

    stats_kernel = functools.partial(_softmax_dim0_stats_kernel, n_total=n)

    m, s = pl.pallas_call(
        stats_kernel,
        out_shape=(jax.ShapeDtypeStruct((1, d), jnp.float32),
                   jax.ShapeDtypeStruct((1, d), jnp.float32)),
        grid_spec=pltpu.PrefetchScalarGridSpec(
            num_scalar_prefetch=0,
            grid=(col_tiles, row_tiles),
            in_specs=[pl.BlockSpec((tile_rows, tile_cols), lambda j, k: (k, j))],
            out_specs=(pl.BlockSpec((1, tile_cols), lambda j, k: (0, j)),
                       pl.BlockSpec((1, tile_cols), lambda j, k: (0, j))),
            scratch_shapes=[pltpu.VMEM((1, tile_cols), jnp.float32),
                            pltpu.VMEM((1, tile_cols), jnp.float32)],
        ),
        compiler_params=pltpu.CompilerParams(
            dimension_semantics=("parallel", "arbitrary"),
            vmem_limit_bytes=vmem_limit,
        ),
    )(x)

    return pl.pallas_call(
        _softmax_dim0_norm_kernel,
        out_shape=jax.ShapeDtypeStruct((n, d), x.dtype),
        grid_spec=pltpu.PrefetchScalarGridSpec(
            num_scalar_prefetch=0,
            grid=(col_tiles, row_tiles),
            in_specs=[pl.BlockSpec((tile_rows, tile_cols), lambda j, k: (k, j)),
                      pl.BlockSpec((1, tile_cols), lambda j, k: (0, j)),
                      pl.BlockSpec((1, tile_cols), lambda j, k: (0, j))],
            out_specs=pl.BlockSpec((tile_rows, tile_cols), lambda j, k: (k, j)),
        ),
        compiler_params=pltpu.CompilerParams(
            dimension_semantics=("parallel", "parallel"),
            vmem_limit_bytes=vmem_limit,
        ),
    )(x, m, s)


def softmax_dim0_2d(x: jax.Array) -> jax.Array:
    """Softmax along axis 0 of a 2-D array (N, D)."""
    n, d = x.shape
    itemsize = max(x.dtype.itemsize, 4)  # size blocks on the f32 in-kernel footprint
    cap = _tpu_vmem_capacity()
    budget = min(cap // 2, 32 * 1024 * 1024)

    if d < _LANE:
        return _softmax_dim0_narrow(x, budget, cap)

    # bytes per column of one block: in + out, double-buffered
    bytes_per_col = n * itemsize * 4
    tile_cols = _round_down_multiple(budget // max(bytes_per_col, 1), _LANE)
    tile_cols = min(tile_cols, 2048)

    if tile_cols < _LANE:
        # Whole reduction axis cannot stay resident even at 128 columns.
        return _softmax_dim0_two_pass(x, budget, cap)

    # Keep >= 2 column tiles when possible so both v7x TensorCores get work.
    if d >= 2 * _LANE:
        tile_cols = min(tile_cols,
                        max(_LANE, _round_down_multiple(pl.cdiv(d, 2), _LANE)))
    tile_cols = min(tile_cols, _round_up_multiple(d, _LANE))

    needed = 4 * n * tile_cols * itemsize
    vmem_limit = min(cap, max(needed + (4 << 20), 32 << 20))

    grid = (pl.cdiv(d, tile_cols),)
    return pl.pallas_call(
        _softmax_dim0_kernel,
        out_shape=jax.ShapeDtypeStruct((n, d), x.dtype),
        grid_spec=pltpu.PrefetchScalarGridSpec(
            num_scalar_prefetch=0,
            grid=grid,
            in_specs=[pl.BlockSpec((n, tile_cols), lambda j: (0, j))],
            out_specs=pl.BlockSpec((n, tile_cols), lambda j: (0, j)),
        ),
        compiler_params=pltpu.CompilerParams(
            dimension_semantics=("parallel",),
            vmem_limit_bytes=vmem_limit,
        ),
    )(x)


def softmax_module(x: jax.Array) -> jax.Array:
    """Equivalent of Softmax().forward(x) == torch.softmax(x, dim=0)."""
    orig_shape = x.shape
    if x.ndim == 1:
        # Put the (single) reduction axis directly on lanes; no transposes.
        out = _softmax_lastdim_2d(x.reshape(1, x.shape[0]), _tpu_vmem_capacity())
        return out.reshape(orig_shape)
    x2d = x.reshape(x.shape[0], -1)
    out = softmax_dim0_2d(x2d)
    return out.reshape(orig_shape)


if __name__ == "__main__":
    key = jax.random.PRNGKey(0)
    k1, k2, k3, k4, k5 = jax.random.split(key, 5)

    tests = [
        jax.random.normal(k1, (2, 4, 16, 16), dtype=jnp.float32),  # 4-D module input
        jax.random.normal(k2, (8, 256), dtype=jnp.float32),        # 2-D, multiple col tiles
        jax.random.normal(k3, (64,), dtype=jnp.float32),           # 1-D, lane-dense path
        jax.random.normal(k4, (10, 300), dtype=jnp.float32),       # unaligned (partial blocks)
    ]

    for x in tests:
        out = jax.block_until_ready(softmax_module(x))
        ref = jax.nn.softmax(x, axis=0)
        assert out.shape == x.shape and out.dtype == x.dtype, x.shape
        assert jnp.allclose(out, ref, atol=1e-5, rtol=1e-5), x.shape

    # Exercise the large-N two-pass fallback explicitly (tiny budget forces it).
    x_tp = jax.random.normal(k5, (64, 256), dtype=jnp.float32)
    out_tp = jax.block_until_ready(
        _softmax_dim0_two_pass(x_tp, budget=64 * 1024, cap=_tpu_vmem_capacity()))
    assert jnp.allclose(out_tp, jax.nn.softmax(x_tp, axis=0), atol=1e-5, rtol=1e-5)

    print("KERNEL_OK")
</pallas_src>

<mosaic_0001>
module attributes {stable_mosaic.version = 11 : i64} {
  func.func @_softmax_dim0_kernel(%arg0: i32, %arg1: memref<2x512xf32, #tpu.memory_space<vmem>>, %arg2: memref<2x512xf32, #tpu.memory_space<vmem>>) attributes {dimension_semantics = [#tpu.dimension_semantics<parallel>], iteration_bounds = array<i64: 2>, scalar_prefetch = 0 : i64, scratch_operands = 0 : i64, tpu.core_type = #tpu.core_type<tc>, window_params = [{transform_indices = @transform_0, window_bounds = array<i64: 2, 512>}, {transform_indices = @transform_1, window_bounds = array<i64: 2, 512>}]} {
    %c0 = arith.constant 0 : index
    %c0_0 = arith.constant 0 : index
    %0 = vector.load %arg1[%c0, %c0_0] : memref<2x512xf32, #tpu.memory_space<vmem>>, vector<2x512xf32>
    %cst = arith.constant dense<0xFF800000> : vector<512xf32>
    %1 = vector.multi_reduction <maximumf>, %0, %cst [0] : vector<2x512xf32> to vector<512xf32>
    %2 = vector.shape_cast %1 : vector<512xf32> to vector<1x512xf32>
    %3 = vector.broadcast %2 : vector<1x512xf32> to vector<2x512xf32>
    %4 = arith.subf %0, %3 : vector<2x512xf32>
    %5 = math.exp %4 : vector<2x512xf32>
    %cst_1 = arith.constant dense<0.000000e+00> : vector<512xf32>
    %6 = vector.multi_reduction <add>, %5, %cst_1 [0] : vector<2x512xf32> to vector<512xf32>
    %7 = vector.shape_cast %6 : vector<512xf32> to vector<1x512xf32>
    %8 = tpu.reciprocal %7 : vector<1x512xf32> -> vector<1x512xf32>
    %9 = vector.broadcast %8 : vector<1x512xf32> to vector<2x512xf32>
    %10 = arith.mulf %5, %9 : vector<2x512xf32>
    %c0_2 = arith.constant 0 : index
    %c0_3 = arith.constant 0 : index
    %11 = vector.load %arg2[%c0_2, %c0_3] : memref<2x512xf32, #tpu.memory_space<vmem>>, vector<2x512xf32>
    tpu.vector_store %arg2[%c0_2, %c0_3], %10 {strides = array<i32>} : memref<2x512xf32, #tpu.memory_space<vmem>>, vector<2x512xf32>,
    return
  }
  func.func @transform_0(%arg0: i32) -> (i32, i32) {
    %c0_i32 = arith.constant 0 : i32
    %c0_i32_0 = arith.constant 0 : i32
    return %c0_i32, %arg0 : i32, i32
  }
  func.func @transform_1(%arg0: i32) -> (i32, i32) {
    %c0_i32 = arith.constant 0 : i32
    %c0_i32_0 = arith.constant 0 : i32
    return %c0_i32, %arg0 : i32, i32
  }
}

</mosaic_0001>

<llo_original>
// kernel: tpu_custom_call.1
$region0: #{tpu_custom_call.1}
  #allocation0 [shape = 'u32[]', space=smem, size = 0x4, offset = 0x4, fixed_abs, tag = 'smem constant byte address 0x4 - core index']
  #allocation1 [shape = 'u32[144,128]{1,0:T(1,128)}', space=vmem, size = 0x12000, scoped, tag = 'internal scratch']
  %s0 = inlined_call_operand.hbm [shape: f32[2,1024], index: 0, kind: input, shape index: {}]
  %s1 = inlined_call_operand.hbm [shape: f32[2,1024], index: 1, kind: output, shape index: {}]
  %s2 = sld [smem:[#allocation0]]
  $region41: #{tpu_custom_call.1} parent=0
    _
  %s4 = ssub.s32 1, %s2
  %s5 = scalar_select 0, %s4, %s2
  $region1: #{tpu_custom_call.1} parent=0
    #allocation2 [shape = 'u8[8192]{0}', space=vmem, size = 0x2000, scoped, tag = 'input window, operand 0']
    #allocation3 [shape = 's32[2]{0}', space=sflag, size = 0x8, scoped, tag = 'scoped memory for tpu_custom_call.1']
    #allocation4 [shape = 's32[2]{0}', space=sflag, size = 0x8, scoped, tag = 'scoped memory for tpu_custom_call.1']
    #allocation5 [shape = 'u8[8192]{0}', space=vmem, size = 0x2000, scoped, tag = 'output window, operand 0']
    %6 = vsyncpa [#allocation3], 0
    %s7 = scalar_lea.sflag [#allocation3], 1
    %8 = vsyncpa %s7, 0
    %9 = vsyncpa [#allocation4], 0
    %s10 = scalar_lea.sflag [#allocation4], 1
    %11 = vsyncpa %s10, 0
    loop: start=0, step=1, limit=4
    $region2: #{tpu_custom_call.1} parent=1 // loop_pre_header
      _
    $region3: #{tpu_custom_call.1} parent=1 // loop_header
      %s13 = sphi 0, %s17
      %p14 = scmp.ge.s32.totalorder %s13, 4
      %s23 = sphi 0, %s25
      %s26 = sphi 0, %s23
      %s27 = sphi 0, %s26
      %s43 = sphi 0, %s27
      %s49 = sphi 0, %s51
      %s52 = sphi 0, %s49
      %s53 = sphi 0, %s52
      %s69 = sphi 0, %s53
    $region4: #{tpu_custom_call.1} parent=1 // loop_header_branch
      %16 = sbr.rel (%p14) target = $region8
    $region5: #{tpu_custom_call.1} parent=1 // loop_body
      %s18 = ssub.s32 %s13, 1
      %s19 = ssub.s32 %s13, 2
      %s20 = sadd.s32 %s13, 1
      %s21 = ssub.s32 %s13, %s20
      %p22 = scmp.eq.s32.totalorder %s21, 0
      %s24 = sadd.s32 %s23, 1
      %s25 = scalar_select %p22, %s23, %s24
      %p28 = pneg %p22
      %p29 = scmp.eq.s32.totalorder %s13, 1
      %p30 = por %p28, %p29
      %p31 = scmp.ne.s32.totalorder %s23, %s26
      %p32 = scmp.eq.s32.totalorder %s13, 0
      %p33 = por %p31, %p32
      %p34 = scmp.ne.s32.totalorder %s23, %s26
      %p35 = scmp.eq.s32.totalorder %s18, 1
      %p36 = por %p34, %p35
      %p37 = scmp.ne.s32.totalorder %s26, %s27
      %p38 = scmp.eq.s32.totalorder %s18, 0
      %p39 = por %p37, %p38
      %p40 = scmp.ne.s32.totalorder %s26, %s27
      %p41 = scmp.eq.s32.totalorder %s19, 1
      %p42 = por %p40, %p41
      %p44 = scmp.ne.s32.totalorder %s27, %s43
      %p45 = scmp.eq.s32.totalorder %s19, 0
      %p46 = por %p44, %p45
      %s47 = ssub.s32 %s13, %s20
      %p48 = scmp.eq.s32.totalorder %s47, 0
      %s50 = sadd.s32 %s49, 1
      %s51 = scalar_select %p48, %s49, %s50
      %p54 = pneg %p48
      %p55 = scmp.eq.s32.totalorder %s13, 1
      %p56 = por %p54, %p55
      %p57 = scmp.ne.s32.totalorder %s49, %s52
      %p58 = scmp.eq.s32.totalorder %s13, 0
      %p59 = por %p57, %p58
      %p60 = scmp.ne.s32.totalorder %s49, %s52
      %p61 = scmp.eq.s32.totalorder %s18, 1
      %p62 = por %p60, %p61
      %p63 = scmp.ne.s32.totalorder %s52, %s53
      %p64 = scmp.eq.s32.totalorder %s18, 0
      %p65 = por %p63, %p64
      %p66 = scmp.ne.s32.totalorder %s52, %s53
      %p67 = scmp.eq.s32.totalorder %s19, 1
      %p68 = por %p66, %p67
      %p70 = scmp.ne.s32.totalorder %s53, %s69
      %p71 = scmp.eq.s32.totalorder %s19, 0
      %p72 = por %p70, %p71
      %p73 = scmp.le.s32.totalorder 1, %s13
      %p74 = scmp.lt.s32.totalorder %s13, 3
      %p75 = pnand %p73, %p74
      %p76 = pneg %p75
      // Predicated region
      $region9: #{tpu_custom_call.1} parent=5 // pred_check
        _
      $region10: #{tpu_custom_call.1} parent=5 // pred_check_branch
        %78 = sbr.rel (%p75) target = $region12
      $region11: #{tpu_custom_call.1} parent=5 // pred_region
        %s79 = ssub.s32 %s13, 1
      $region12: #{tpu_custom_call.1} parent=5 // pred_fallthru
        _
      %p80 = scmp.lt.s32.totalorder %s13, 2
      // Predicated region
      $region13: #{tpu_custom_call.1} parent=5 // pred_check
        %p81 = pneg %p80
      $region14: #{tpu_custom_call.1} parent=5 // pred_check_branch
        %83 = sbr.rel (%p81) target = $region16
      $region15: #{tpu_custom_call.1} parent=5 // pred_region
        // Predicated region
        $region17: #{tpu_custom_call.1} parent=15 // pred_check
          %p84 = pneg %p33
        $region18: #{tpu_custom_call.1} parent=15 // pred_check_branch
          %86 = sbr.rel (%p84) target = $region20
        $region19: #{tpu_custom_call.1} parent=15 // pred_region
          %s87 = sand.u32 %s23, 1
          %s88 = scalar_lea.sflag [#allocation3], %s87
          %s89 = sand.u32 %s23, 1
          %s90 = smul.addr %s89, 8
          %s91 = scalar_lea.vmem [#allocation2], %s90
          %s92 = smul.u32 4, %s13
          %s94 = ssub.s32 128, 128
          %95 = vsyncadd %s88, %s94
          %s96 = smul.addr %s92, 32
          %s97 = scalar_lea.hbm %s0, %s96
          %s99 = sshll.u32 %s91, 4
          %s100 = int_to_ptr.vmem [resolvable:$true] %s99
          %102 = dma.hbm_to_vmem [thread:$0]  %s97, 128, %s100, %s88
        $region20: #{tpu_custom_call.1} parent=15 // pred_fallthru
          _
      $region16: #{tpu_custom_call.1} parent=5 // pred_fallthru
        _
      %p103 = scmp.le.s32.totalorder 1, %s13
      %p104 = scmp.lt.s32.totalorder %s13, 3
      %p105 = pnand %p103, %p104
      %p106 = pneg %p105
      // Predicated region
      $region21: #{tpu_custom_call.1} parent=5 // pred_check
        _
      $region22: #{tpu_custom_call.1} parent=5 // pred_check_branch
        %108 = sbr.rel (%p105) target = $region24
      $region23: #{tpu_custom_call.1} parent=5 // pred_region
        %s109 = ssub.s32 %s13, 1
        %s110 = sand.u32 %s26, 1
        %s111 = scalar_lea.sflag [#allocation3], %s110
        %s112 = sand.u32 %s26, 1
        %s113 = smul.addr %s112, 8
        %s114 = scalar_lea.vmem [#allocation2], %s113
        // Predicated region
        $region25: #{tpu_custom_call.1} parent=23 // pred_check
          %p115 = pneg %p39
        $region26: #{tpu_custom_call.1} parent=23 // pred_check_branch
          %117 = sbr.rel (%p115) target = $region28
        $region27: #{tpu_custom_call.1} parent=23 // pred_region
          %118 = dma.done %s111, 128
        $region28: #{tpu_custom_call.1} parent=23 // pred_fallthru
          _
        %s119 = sand.u32 %s26, 1
        %s120 = scalar_lea.sflag [#allocation3], %s119
        %s121 = sand.u32 %s26, 1
        %s122 = smul.addr %s121, 8
        %s123 = scalar_lea.vmem [#allocation2], %s122
        %p124 = pneg %p39
        %p125 = pneg %p36
        %p126 = pneg %p65
        %p127 = pneg %p62
        %s128 = sand.u32 %s52, 1
        %s129 = scalar_lea.sflag [#allocation4], %s128
        %s130 = sand.u32 %s52, 1
        %s131 = smul.addr %s130, 8
        %s132 = scalar_lea.vmem [#allocation5], %s131
        %s133 = smul.u32 4, %s18
        %s134 = smul.u32 4, %s18
        %v135 = vld [vmem:[%s114] sm:$0xff]
        %v137 = vcombine.high %v135, %v135
        %v139 = vunpack.c.l.s4 1983009808
        %v140 = vunpack.c.0.s8 %v139
        %v141 = vlaneseq
        %v142 = vshrl.u32 %v141, 7
        %v143 = vsub.s32 %v140, %v142
        %v144 = vrot.slane %v135, %v143
        %v146 = vunpack.c.l.s4 1983009808
        %v147 = vunpack.c.0.s8 %v146
        %v148 = vlaneseq
        %v149 = vshrl.u32 %v148, 7
        %v150 = vsub.s32 %v147, %v149
        %v151 = vrot.slane %v137, %v150
        %v152 = vcombine.high %v144, %v144
        %v153 = vcombine.high %v151, %v151
        %vm158 = vcmask 1041408
        %v159 = vsel %vm158, %v144, -inf
        %v160 = vrot.slane %v159, 4
        %v161 = vmax.f32 %v159, %v160
        %v162 = vrot.slane %v161, 2
        %v163 = vmax.f32 %v161, %v162
        %v164 = vrot.slane %v163, 1
        %v165 = vmax.f32 %v163, %v164
        %v166 = vsel %vm158, %v152, -inf
        %v167 = vrot.slane %v166, 4
        %v168 = vmax.f32 %v166, %v167
        %v169 = vrot.slane %v168, 2
        %v170 = vmax.f32 %v168, %v169
        %v171 = vrot.slane %v170, 1
        %v172 = vmax.f32 %v170, %v171
        %v173 = vsel %vm158, %v151, -inf
        %v174 = vrot.slane %v173, 4
        %v175 = vmax.f32 %v173, %v174
        %v176 = vrot.slane %v175, 2
        %v177 = vmax.f32 %v175, %v176
        %v178 = vrot.slane %v177, 1
        %v179 = vmax.f32 %v177, %v178
        %v180 = vsel %vm158, %v153, -inf
        %v181 = vrot.slane %v180, 4
        %v182 = vmax.f32 %v180, %v181
        %v183 = vrot.slane %v182, 2
        %v184 = vmax.f32 %v182, %v183
        %v185 = vrot.slane %v184, 1
        %v186 = vmax.f32 %v184, %v185
        %v191 = vcombine.low %v165, %v172
        %v192 = vcombine.low %v179, %v186
        %v194 = vunpack.c.l.s4 1983009808
        %v195 = vunpack.c.0.s8 %v194
        %v196 = vlaneseq
        %v197 = vshrl.u32 %v196, 7
        %v198 = vsub.s32 %v195, %v197
        %v199 = vrot.slane %v191, %v198
        %v201 = vunpack.c.l.s4 1983009808
        %v202 = vunpack.c.0.s8 %v201
        %v203 = vlaneseq
        %v204 = vshrl.u32 %v203, 7
        %v205 = vsub.s32 %v202, %v204
        %v206 = vrot.slane %v192, %v205
        %v207 = vcombine.low %v199, %v206
        %v209 = vsub.f32 %v135, %v207
        %v210 = vmul.f32 %v209, 1.442695
        %v211 = vpow.pop %v210
        %v213 = vcombine.high %v211, %v211
        %v215 = vunpack.c.l.s4 1983009808
        %v216 = vunpack.c.0.s8 %v215
        %v217 = vlaneseq
        %v218 = vshrl.u32 %v217, 7
        %v219 = vsub.s32 %v216, %v218
        %v220 = vrot.slane %v211, %v219
        %v222 = vunpack.c.l.s4 1983009808
        %v223 = vunpack.c.0.s8 %v222
        %v224 = vlaneseq
        %v225 = vshrl.u32 %v224, 7
        %v226 = vsub.s32 %v223, %v225
        %v227 = vrot.slane %v213, %v226
        %v228 = vcombine.high %v220, %v220
        %v229 = vcombine.high %v227, %v227
        %v234 = vsel %vm158, %v220, 0.0
        %v235 = vrot.slane %v234, 4
        %v236 = vadd.f32 %v234, %v235
        %v237 = vrot.slane %v236, 2
        %v238 = vadd.f32 %v236, %v237
        %v239 = vrot.slane %v238, 1
        %v240 = vadd.f32 %v238, %v239
        %v241 = vsel %vm158, %v228, 0.0
        %v242 = vrot.slane %v241, 4
        %v243 = vadd.f32 %v241, %v242
        %v244 = vrot.slane %v243, 2
        %v245 = vadd.f32 %v243, %v244
        %v246 = vrot.slane %v245, 1
        %v247 = vadd.f32 %v245, %v246
        %v248 = vsel %vm158, %v227, 0.0
        %v249 = vrot.slane %v248, 4
        %v250 = vadd.f32 %v248, %v249
        %v251 = vrot.slane %v250, 2
        %v252 = vadd.f32 %v250, %v251
        %v253 = vrot.slane %v252, 1
        %v254 = vadd.f32 %v252, %v253
        %v255 = vsel %vm158, %v229, 0.0
        %v256 = vrot.slane %v255, 4
        %v257 = vadd.f32 %v255, %v256
        %v258 = vrot.slane %v257, 2
        %v259 = vadd.f32 %v257, %v258
        %v260 = vrot.slane %v259, 1
        %v261 = vadd.f32 %v259, %v260
        %v262 = vrcp.pop %v240
        %v263 = vrcp.pop %v247
        %v264 = vrcp.pop %v254
        %v265 = vrcp.pop %v261
        %v270 = vcombine.low %v262, %v263
        %v271 = vcombine.low %v264, %v265
        %v273 = vunpack.c.l.s4 1983009808
        %v274 = vunpack.c.0.s8 %v273
        %v275 = vlaneseq
        %v276 = vshrl.u32 %v275, 7
        %v277 = vsub.s32 %v274, %v276
        %v278 = vrot.slane %v270, %v277
        %v280 = vunpack.c.l.s4 1983009808
        %v281 = vunpack.c.0.s8 %v280
        %v282 = vlaneseq
        %v283 = vshrl.u32 %v282, 7
        %v284 = vsub.s32 %v281, %v283
        %v285 = vrot.slane %v271, %v284
        %v286 = vcombine.low %v278, %v285
        %v288 = vmul.f32 %v211, %v286
        %289 = vst [vmem:[%s132] sm:$0xff] %v288
        %s290 = sand.u32 %s52, 1
        %s291 = scalar_lea.sflag [#allocation4], %s290
        %s292 = sand.u32 %s52, 1
        %s293 = smul.addr %s292, 8
        %s294 = scalar_lea.vmem [#allocation5], %s293
        // Predicated region
        $region29: #{tpu_custom_call.1} parent=23 // pred_check
          %p295 = pneg %p62
        $region30: #{tpu_custom_call.1} parent=23 // pred_check_branch
          %297 = sbr.rel (%p295) target = $region32
        $region31: #{tpu_custom_call.1} parent=23 // pred_region
          %s298 = smul.u32 4, %s18
          %s300 = ssub.s32 128, 128
          %301 = vsyncadd %s291, %s300
          %s302 = smul.addr %s298, 32
          %s303 = scalar_lea.hbm %s1, %s302
          %s305 = sshll.u32 %s294, 4
          %s306 = int_to_ptr.vmem [resolvable:$true] %s305
          %308 = dma.vmem_to_hbm [thread:$0]  %s306, 128, %s303, %s291
        $region32: #{tpu_custom_call.1} parent=23 // pred_fallthru
          _
      $region24: #{tpu_custom_call.1} parent=5 // pred_fallthru
        _
      %p309 = scmp.le.s32.totalorder 2, %s13
      // Predicated region
      $region33: #{tpu_custom_call.1} parent=5 // pred_check
        %p310 = pneg %p309
      $region34: #{tpu_custom_call.1} parent=5 // pred_check_branch
        %312 = sbr.rel (%p310) target = $region36
      $region35: #{tpu_custom_call.1} parent=5 // pred_region
        %s313 = ssub.s32 %s13, 2
        // Predicated region
        $region37: #{tpu_custom_call.1} parent=35 // pred_check
          %p314 = pneg %p68
        $region38: #{tpu_custom_call.1} parent=35 // pred_check_branch
          %316 = sbr.rel (%p314) target = $region40
        $region39: #{tpu_custom_call.1} parent=35 // pred_region
          %s317 = sand.u32 %s53, 1
          %s318 = scalar_lea.sflag [#allocation4], %s317
          %s319 = sand.u32 %s53, 1
          %s320 = smul.addr %s319, 8
          %s321 = scalar_lea.vmem [#allocation5], %s320
          %322 = dma.done %s318, 128
        $region40: #{tpu_custom_call.1} parent=35 // pred_fallthru
          _
      $region36: #{tpu_custom_call.1} parent=5 // pred_fallthru
        _
    $region6: #{tpu_custom_call.1} parent=1 // loop_footer
      %s17 = sadd.s32 1, %s13
    $region7: #{tpu_custom_call.1} parent=1 // loop_footer_branch
      %12 = sbr.rel target = $region3
    $region8: #{tpu_custom_call.1} parent=1 // loop_exit
      _
    %323 = vsyncpa [#allocation3], 1
    %s324 = scalar_lea.sflag [#allocation3], 1
    %325 = vsyncpa %s324, 1
    %326 = vsyncpa [#allocation4], 1
    %s327 = scalar_lea.sflag [#allocation4], 1
    %328 = vsyncpa %s327, 1

</llo_original>
